<compile_context>
chip_gen: v5e
topology: v5e:2x2
jax: 0.10.0
libtpu: 0.0.40
codegen_flags: <defaults>
</compile_context>

<pallas_src>
import math
from functools import partial

import jax
import jax.numpy as jnp
from jax.experimental import pallas as pl
from jax.experimental.pallas import tpu as pltpu

NEGATIVE_SLOPE = 0.2  # kept for the reference check; the op chain is a no-op

_LANE = 128
_MAX_TB = 128 * 1024  # 128K lanes: ~6 MB double-buffered working set


def _linear_t_kernel(xt_ref, w_ref, b_ref, ot_ref):
    # xt_ref: (IN, TB)  w_ref: (OUT, IN)  b_ref: (OUT, 1)  ot_ref: (OUT, TB)
    xt = xt_ref[...]
    w = w_ref[...]
    out_f, in_f = w.shape
    tb = xt.shape[1]

    # Start from the broadcast bias, accumulate K (=2) broadcast FMAs on the
    # VPU.  in_f is tiny & static -> fully unrolled.
    acc = jnp.broadcast_to(b_ref[...], (out_f, tb)).astype(jnp.float32)
    for k in range(in_f):
        acc = acc + w[:, k : k + 1] * xt[k : k + 1, :]

    # v2/v3/where chain deleted: provably equal to acc (identity activation).
    ot_ref[...] = acc.astype(ot_ref.dtype)


def _choose_tile(batch: int) -> int:
    """Batch tile: full array when small; else big, 128-aligned, >=4 steps."""
    if batch <= 4 * _LANE:
        return batch
    quarter = pl.cdiv(batch, 4)                       # >= 4 grid steps (v7x megacore)
    quarter = ((quarter + _LANE - 1) // _LANE) * _LANE  # lane-aligned -> unmasked vst
    return max(_LANE, min(_MAX_TB, quarter))


def linear_tn(xt, weight, bias2d):
    """Feature-major linear (no wrapper transposes).

    xt:     (in_f, B)   float32
    weight: (out_f, in_f) float32 (PyTorch layout)
    bias2d: (out_f, 1)  float32
    returns (out_f, B)  float32
    """
    in_f, batch = xt.shape
    out_f = weight.shape[0]

    tb = _choose_tile(batch)
    grid = (pl.cdiv(batch, tb),)

    cost = pl.CostEstimate(
        flops=2 * batch * in_f * out_f,
        transcendentals=0,
        bytes_accessed=4 * (batch * (in_f + out_f) + out_f * in_f + out_f),
    )

    return pl.pallas_call(
        _linear_t_kernel,
        out_shape=jax.ShapeDtypeStruct((out_f, batch), xt.dtype),
        grid=grid,
        in_specs=[
            pl.BlockSpec((in_f, tb), lambda i: (0, i)),     # x^T batch tile
            pl.BlockSpec((out_f, in_f), lambda i: (0, 0)),  # full weight
            pl.BlockSpec((out_f, 1), lambda i: (0, 0)),     # full bias
        ],
        out_specs=pl.BlockSpec((out_f, tb), lambda i: (0, i)),
        compiler_params=pltpu.CompilerParams(
            dimension_semantics=("parallel",),
        ),
        cost_estimate=cost,
    )(xt, weight, bias2d)


@jax.jit
def model_forward(x, weight, bias):
    """PyTorch-layout interface.

    x: (B, 2) f32; weight: (4, 2) f32 (PyTorch layout); bias: (4,) f32.
    returns (B, 4) f32 — identical to Model.forward.
    """
    out_f = weight.shape[0]
    xt = x.T                       # (in_f, B)   layout plumbing under this jit
    b2d = bias.reshape(out_f, 1)   # (out_f, 1)
    out_t = linear_tn(xt, weight, b2d)
    return out_t.T                 # back to PyTorch layout (B, out_f)


if __name__ == "__main__":
    key = jax.random.PRNGKey(0)
    kx, kw, kb = jax.random.split(key, 3)

    # Inputs matching the module: x1 = torch.randn(2, 2), Linear(2, 4).
    in_features, out_features = 2, 4
    x = jax.random.normal(kx, (2, in_features), dtype=jnp.float32)

    bound = 1.0 / math.sqrt(in_features)
    weight = jax.random.uniform(kw, (out_features, in_features),
                                minval=-bound, maxval=bound, dtype=jnp.float32)
    bias = jax.random.uniform(kb, (out_features,),
                              minval=-bound, maxval=bound, dtype=jnp.float32)

    out = jax.block_until_ready(model_forward(x, weight, bias))

    # Reference: the FULL original op chain (v1 -> v2 -> v3 -> where).
    v1 = x @ weight.T + bias
    v2 = v1 > 0.0
    v3 = v2.astype(jnp.float32) * NEGATIVE_SLOPE
    ref = jnp.where(v1 != 0.0, v1, v3)

    assert out.shape == ref.shape, (out.shape, ref.shape)
    assert jnp.allclose(out, ref, atol=1e-5, rtol=1e-5), (out, ref)

    print("KERNEL_OK")
</pallas_src>

<mosaic_0001>
module attributes {stable_mosaic.version = 11 : i64} {
  func.func @_linear_t_kernel(%arg0: i32, %arg1: memref<2x2xf32, #tpu.memory_space<vmem>>, %arg2: memref<4x2xf32, #tpu.memory_space<vmem>>, %arg3: memref<4x1xf32, #tpu.memory_space<vmem>>, %arg4: memref<4x2xf32, #tpu.memory_space<vmem>>) attributes {dimension_semantics = [#tpu.dimension_semantics<parallel>], iteration_bounds = array<i64: 1>, scalar_prefetch = 0 : i64, scratch_operands = 0 : i64, tpu.core_type = #tpu.core_type<tc>, window_params = [{transform_indices = @transform_0, window_bounds = array<i64: 2, 2>}, {pipeline_mode = #tpu.pipeline_mode<synchronous>, transform_indices = @transform_1, window_bounds = array<i64: 4, 2>}, {pipeline_mode = #tpu.pipeline_mode<synchronous>, transform_indices = @transform_2, window_bounds = array<i64: 4, 1>}, {transform_indices = @transform_3, window_bounds = array<i64: 4, 2>}]} {
    %c0 = arith.constant 0 : index
    %c0_0 = arith.constant 0 : index
    %0 = vector.load %arg1[%c0, %c0_0] : memref<2x2xf32, #tpu.memory_space<vmem>>, vector<2x2xf32>
    %c0_1 = arith.constant 0 : index
    %c0_2 = arith.constant 0 : index
    %1 = vector.load %arg2[%c0_1, %c0_2] : memref<4x2xf32, #tpu.memory_space<vmem>>, vector<4x2xf32>
    %c0_3 = arith.constant 0 : index
    %c0_4 = arith.constant 0 : index
    %2 = vector.load %arg3[%c0_3, %c0_4] : memref<4x1xf32, #tpu.memory_space<vmem>>, vector<4x1xf32>
    %3 = vector.shape_cast %2 : vector<4x1xf32> to vector<4x1xf32>
    %4 = vector.broadcast %3 : vector<4x1xf32> to vector<4x2xf32>
    %5 = vector.extract_strided_slice %1 {offsets = [0, 0], sizes = [4, 1], strides = [1, 1]} : vector<4x2xf32> to vector<4x1xf32>
    %6 = vector.extract_strided_slice %0 {offsets = [0, 0], sizes = [1, 2], strides = [1, 1]} : vector<2x2xf32> to vector<1x2xf32>
    %7 = vector.broadcast %5 : vector<4x1xf32> to vector<4x2xf32>
    %8 = vector.broadcast %6 : vector<1x2xf32> to vector<4x2xf32>
    %9 = arith.mulf %7, %8 : vector<4x2xf32>
    %10 = arith.addf %4, %9 : vector<4x2xf32>
    %11 = vector.extract_strided_slice %1 {offsets = [0, 1], sizes = [4, 1], strides = [1, 1]} : vector<4x2xf32> to vector<4x1xf32>
    %12 = vector.extract_strided_slice %0 {offsets = [1, 0], sizes = [1, 2], strides = [1, 1]} : vector<2x2xf32> to vector<1x2xf32>
    %13 = vector.broadcast %11 : vector<4x1xf32> to vector<4x2xf32>
    %14 = vector.broadcast %12 : vector<1x2xf32> to vector<4x2xf32>
    %15 = arith.mulf %13, %14 : vector<4x2xf32>
    %16 = arith.addf %10, %15 : vector<4x2xf32>
    %c0_5 = arith.constant 0 : index
    %c0_6 = arith.constant 0 : index
    %17 = vector.load %arg4[%c0_5, %c0_6] : memref<4x2xf32, #tpu.memory_space<vmem>>, vector<4x2xf32>
    tpu.vector_store %arg4[%c0_5, %c0_6], %16 {strides = array<i32>} : memref<4x2xf32, #tpu.memory_space<vmem>>, vector<4x2xf32>,
    return
  }
  func.func @transform_0(%arg0: i32) -> (i32, i32) {
    %c0_i32 = arith.constant 0 : i32
    %c0_i32_0 = arith.constant 0 : i32
    return %c0_i32, %arg0 : i32, i32
  }
  func.func @transform_1(%arg0: i32) -> (i32, i32) {
    %c0_i32 = arith.constant 0 : i32
    %c0_i32_0 = arith.constant 0 : i32
    %c0_i32_1 = arith.constant 0 : i32
    return %c0_i32, %c0_i32_0 : i32, i32
  }
  func.func @transform_2(%arg0: i32) -> (i32, i32) {
    %c0_i32 = arith.constant 0 : i32
    %c0_i32_0 = arith.constant 0 : i32
    %c0_i32_1 = arith.constant 0 : i32
    return %c0_i32, %c0_i32_0 : i32, i32
  }
  func.func @transform_3(%arg0: i32) -> (i32, i32) {
    %c0_i32 = arith.constant 0 : i32
    %c0_i32_0 = arith.constant 0 : i32
    return %c0_i32, %arg0 : i32, i32
  }
}

</mosaic_0001>

<llo_original>
// kernel: model_forward.1
$region0: #{model_forward.1}
  #allocation0 [shape = 'u32[]', space=smem, size = 0x4, offset = 0x4, fixed_abs, tag = 'smem constant byte address 0x4 - core index']
  #allocation1 [shape = 'u32[72,128]{1,0:T(1,128)}', space=vmem, size = 0x9000, scoped, tag = 'internal scratch']
  %s0 = inlined_call_operand.vmem [shape: f32[2,2], index: 0, kind: input, shape index: {}]
  %s1 = inlined_call_operand.vmem [shape: f32[4,2], index: 1, kind: input, shape index: {}]
  %s2 = inlined_call_operand.vmem [shape: f32[4,1], index: 2, kind: input, shape index: {}]
  %s3 = inlined_call_operand.vmem [shape: f32[4,2], index: 3, kind: output, shape index: {}]
  %s4 = sld [smem:[#allocation0]]
  $region22: #{model_forward.1} parent=0
    _
  %s6 = ssub.s32 1, %s4
  %s7 = scalar_select 0, %s6, %s4
  // Predicated region
  $region2: #{model_forward.1} parent=0 // pred_check
    _
  $region3: #{model_forward.1} parent=0 // pred_check_branch
    %9 = sbr.rel (0) target = $region5
  $region4: #{model_forward.1} parent=0 // pred_region
    _
  $region5: #{model_forward.1} parent=0 // pred_fallthru
    _
  // Predicated region
  $region6: #{model_forward.1} parent=0 // pred_check
    _
  $region7: #{model_forward.1} parent=0 // pred_check_branch
    %11 = sbr.rel (0) target = $region9
  $region8: #{model_forward.1} parent=0 // pred_region
    _
  $region9: #{model_forward.1} parent=0 // pred_fallthru
    _
  // Predicated region
  $region10: #{model_forward.1} parent=0 // pred_check
    _
  $region11: #{model_forward.1} parent=0 // pred_check_branch
    %13 = sbr.rel (0) target = $region13
  $region12: #{model_forward.1} parent=0 // pred_region
    _
  $region13: #{model_forward.1} parent=0 // pred_fallthru
    _
  %v14 = vld [vmem:[%s0] sm:$0x3]
  %v15 = vld [vmem:[%s1] sm:$0xf]
  %v16 = vld [vmem:[%s2] sm:$0xf]
  %18 = vset.pattern.permute.xlu0 0
  %19 = vperm.xlu0 %18, %v16
  %v20 = vpop.permute.xlu0 %19
  %23 = vset.pattern.permute.xlu0 0
  %24 = vperm.xlu0 %23, %v15
  %v25 = vpop.permute.xlu0 %24
  %v27 = vperm.slane %v14, 0
  %v28 = vmul.f32 %v25, %v27
  %v29 = vadd.f32 %v20, %v28
  %30 = vset.pattern.permute.xlu0 1
  %31 = vperm.xlu0 %30, %v15
  %v32 = vpop.permute.xlu0 %31
  %v34 = vperm.slane %v14, 1
  %v35 = vmul.f32 %v32, %v34
  %v36 = vadd.f32 %v29, %v35
  %vm37 = vcmask 11264
  %38 = vst.msk [vmem:[%s3] sm:$0xf] %vm37, %v36
  // Predicated region
  $region14: #{model_forward.1} parent=0 // pred_check
    _
  $region15: #{model_forward.1} parent=0 // pred_check_branch
    %40 = sbr.rel (0) target = $region17
  $region16: #{model_forward.1} parent=0 // pred_region
    _
  $region17: #{model_forward.1} parent=0 // pred_fallthru
    _
  // Predicated region
  $region18: #{model_forward.1} parent=0 // pred_check
    _
  $region19: #{model_forward.1} parent=0 // pred_check_branch
    %42 = sbr.rel (0) target = $region21
  $region20: #{model_forward.1} parent=0 // pred_region
    _
  $region21: #{model_forward.1} parent=0 // pred_fallthru
    _

</llo_original>
